<compile_context>
chip_gen: v5e
topology: v5e:2x2
jax: 0.10.0
libtpu: 0.0.40
codegen_flags: <defaults>
</compile_context>

<pallas_src>
import jax
import jax.numpy as jnp
from jax import lax
from jax.experimental import pallas as pl
from jax.experimental.pallas import tpu as pltpu


def _round_up(x, m):
    return ((x + m - 1) // m) * m


def _vmem_capacity_bytes():
    """Best-effort per-core VMEM capacity; generation-aware fallback via device_kind."""
    try:
        info = pltpu.get_tpu_info()
        cap = getattr(info, "vmem_capacity_bytes", None)
        if cap:
            return int(cap)
    except Exception:
        pass
    try:
        kind = jax.devices()[0].device_kind.lower()
        if "v2" in kind or "v3" in kind:
            return 16 << 20
        if "v4" in kind or "v5" in kind or "v6" in kind:
            return 128 << 20
        if "v7" in kind or "7x" in kind:
            return 64 << 20
    except Exception:
        pass
    return 64 << 20


def _make_probe_kernel(s_tile):
    def kernel(x_ref, a_ref, o_ref, xp_sc, dcol_sc, drow_sc):
        # x_ref: (TB, S, R) mxu-dtype, a_ref: (R, R) mxu-dtype (already A + A^T),
        # o_ref: (TB, St, S) f32, xp_sc: (TB, S, R) mxu-dtype,
        # dcol_sc: (TB, S, 1) f32, drow_sc: (TB, 1, S) f32.
        it = pl.program_id(1)

        @pl.when(it == 0)
        def _init():
            x = x_ref[...]
            a = a_ref[...]
            tb, s, r = x.shape
            # Xp = X @ (A + A^T): the dominant S*R^2 MXU matmul, once per sentence block.
            xp = lax.dot_general(
                x.reshape(tb * s, r), a,
                dimension_numbers=(((1,), (0,)), ((), ())),
                preferred_element_type=jnp.float32,
            ).reshape(tb, s, r)
            xp_mm = xp.astype(xp_sc.dtype)      # rounded operand reused by the cross-term
            xp_sc[...] = xp_mm
            # d_i = x_i^T A x_i = 0.5 * x_i^T (A + A^T) x_i, from the SAME rounded operands
            # that feed C (f32 products/accumulation) => dists[i, i] cancels to ~0.
            d = 0.5 * jnp.sum(
                xp_mm.astype(jnp.float32) * x.astype(jnp.float32), axis=-1)   # (TB, S)
            dcol_sc[...] = d[:, :, None]
            drow_sc[...] = d[:, None, :]

        i0 = pl.multiple_of(it * s_tile, s_tile)
        xp_t = xp_sc[:, pl.ds(i0, s_tile), :]                     # (TB, St, R)
        # C[b, i, j] = Xp[i] . X[j]: contract R of BOTH operands (no explicit x^T relayout
        # in the kernel; Mosaic feeds the transposed operand to the MXU directly).
        c = lax.dot_general(
            xp_t, x_ref[...],
            dimension_numbers=(((2,), (2,)), ((0,), (0,))),
            preferred_element_type=jnp.float32,
        )                                                          # (TB, St, S) f32
        dists = dcol_sc[:, pl.ds(i0, s_tile), :] + drow_sc[...] - c
        o_ref[...] = dists.astype(o_ref.dtype)

    return kernel


def two_word_non_psd_probe(batch, proj, *, mxu_dtype=jnp.bfloat16, vmem_cap_bytes=None):
    """batch: (B, S, R), proj: (R, R) -> (B, S, S).

    mxu_dtype=jnp.bfloat16 (default): bf16 MXU operands with f32 accumulation — the fast
    path on every TPU generation. mxu_dtype=None keeps f32 matmuls (exact module semantics).
    """
    B, S, R = batch.shape
    assert proj.shape == (R, R)
    out_dtype = batch.dtype

    in_dtype = jnp.dtype(mxu_dtype) if mxu_dtype is not None else jnp.dtype(jnp.float32)
    x_bytes = in_dtype.itemsize
    sub = 8 * (4 // x_bytes)                      # sublane multiple: 8 (f32) / 16 (bf16)

    # Symmetrize once and cast operands in the wrapper: no in-kernel transpose, no per-step
    # casts, halved DMA / VMEM bytes for X and A in the bf16 path.
    a32 = proj.astype(jnp.float32)
    a_sym = (a32 + a32.T).astype(in_dtype)
    x_in = batch.astype(in_dtype)

    # Padding: lane dim (R) -> 128. S only needs the sublane multiple unless it is already
    # >= 128, in which case keep the output's last dim lane-dense (128 multiples).
    # (256-wide rounding for v6e/v7x MXUs is intentionally skipped: the extra FLOPs usually
    #  outweigh the width gain unless S is huge.)
    R_pad = _round_up(R, 128)
    S_pad = _round_up(S, 128) if S > 128 else _round_up(S, sub)

    # Tile output rows (i) for long sequences so the output block + C intermediate stay
    # bounded (matters on v7x's 64 MiB VMEM).
    if S_pad > 512:
        s_tile = 256
        S_pad = _round_up(S_pad, s_tile)
    else:
        s_tile = S_pad
    n_it = S_pad // s_tile

    # --- VMEM budget -> sentences per grid step (tb) ---
    cap = int(vmem_cap_bytes) if vmem_cap_bytes is not None else _vmem_capacity_bytes()
    budget = int(cap * 0.7)
    per_sentence = (
        2 * S_pad * R_pad * x_bytes        # X block, double-buffered
        + S_pad * R_pad * x_bytes          # Xp scratch
        + S_pad * R_pad * 4                # f32 Xp temporary at init
        + 2 * s_tile * S_pad * 4           # output block, double-buffered
        + s_tile * S_pad * 4               # C / dists temporary
        + 4 * S_pad * 4                    # diag scratches
    )
    fixed = 2 * R_pad * R_pad * x_bytes    # A (counted double-buffered to be safe)
    tb = max(1, (budget - fixed) // per_sentence)
    tb = min(tb, B)
    tb = max(1, min(tb, -(-B // 2)))       # >= 2 steps on the parallel axis (v7x megacore)

    B_pad = _round_up(B, tb)
    grid = (B_pad // tb, n_it)

    need = fixed + tb * per_sentence
    vmem_limit = int(min(int(cap * 0.85), max(int(need * 1.25) + (8 << 20), 32 << 20)))

    # Zero padding is exact: padded R columns contribute 0; padded S rows / batch entries
    # are sliced off below.
    x_p = jnp.pad(x_in, ((0, B_pad - B), (0, S_pad - S), (0, R_pad - R)))
    a_p = jnp.pad(a_sym, ((0, R_pad - R), (0, R_pad - R)))

    flops = 2 * B_pad * S_pad * R_pad * (R_pad + S_pad)
    bytes_accessed = (B_pad * S_pad * R_pad * x_bytes + R_pad * R_pad * x_bytes
                      + B_pad * S_pad * S_pad * 4)
    cost = pl.CostEstimate(flops=flops, transcendentals=0, bytes_accessed=bytes_accessed)

    def build(single_buffer_a):
        a_idx = lambda b, it: (0, 0)
        if single_buffer_a:
            # A's block index is constant across the grid -> single buffer is enough.
            a_spec = pl.BlockSpec((R_pad, R_pad), a_idx, pipeline_mode=pl.Buffered(1))
        else:
            a_spec = pl.BlockSpec((R_pad, R_pad), a_idx)
        return pl.pallas_call(
            _make_probe_kernel(s_tile),
            out_shape=jax.ShapeDtypeStruct((B_pad, S_pad, S_pad), jnp.float32),
            grid_spec=pltpu.PrefetchScalarGridSpec(
                num_scalar_prefetch=0,
                grid=grid,
                in_specs=[
                    pl.BlockSpec((tb, S_pad, R_pad), lambda b, it: (b, 0, 0)),
                    a_spec,
                ],
                out_specs=pl.BlockSpec((tb, s_tile, S_pad), lambda b, it: (b, it, 0)),
                scratch_shapes=[
                    pltpu.VMEM((tb, S_pad, R_pad), in_dtype),   # Xp (rounded), sentence-resident
                    pltpu.VMEM((tb, S_pad, 1), jnp.float32),    # d (column orientation)
                    pltpu.VMEM((tb, 1, S_pad), jnp.float32),    # d (row orientation)
                ],
            ),
            compiler_params=pltpu.CompilerParams(
                dimension_semantics=("parallel", "arbitrary"),
                vmem_limit_bytes=vmem_limit,
            ),
            cost_estimate=cost,
        )

    try:
        out_padded = build(single_buffer_a=True)(x_p, a_p)
    except Exception:
        # pipeline_mode / Buffered(1) unsupported in this jax version -> double-buffered A.
        out_padded = build(single_buffer_a=False)(x_p, a_p)

    return out_padded[:B, :S, :S].astype(out_dtype)


def _reference(batch, proj):
    # Pure-JAX mirror of the PyTorch forward (high precision for the correctness check).
    diffs = batch[:, :, None, :] - batch[:, None, :, :]                 # (B, S, S, R)
    pt = jnp.einsum('bijr,rs->bijs', diffs, proj, precision='highest')
    return jnp.einsum('bijs,bijs->bij', pt, diffs, precision='highest')


if __name__ == "__main__":
    # Small shapes consistent with the module: batch=2, seq=8, hidden=32.
    B, S, H = 2, 8, 32
    key = jax.random.PRNGKey(0)
    k_x, k_p = jax.random.split(key)

    batch = jax.random.normal(k_x, (B, S, H), dtype=jnp.float32)
    # nn.init.uniform_(self.proj, -0.05, 0.05)
    proj = jax.random.uniform(k_p, (H, H), minval=-0.05, maxval=0.05, dtype=jnp.float32)

    ref = _reference(batch, proj)

    # Default path: bf16 MXU operands, f32 accumulation (fast path on all generations).
    out = jax.block_until_ready(two_word_non_psd_probe(batch, proj))
    assert out.shape == (B, S, S)
    assert jnp.allclose(out, ref, atol=2.5e-1, rtol=1e-1), "bf16 path mismatch vs reference"

    # Exact-semantics f32 path.
    out_f32 = jax.block_until_ready(two_word_non_psd_probe(batch, proj, mxu_dtype=None))
    assert out_f32.shape == (B, S, S)
    assert jnp.allclose(out_f32, ref, atol=1e-3, rtol=1e-3), "f32 path mismatch vs reference"

    print("KERNEL_OK")
</pallas_src>

<mosaic_0001>
module attributes {stable_mosaic.version = 11 : i64} {
  func.func @kernel(%arg0: i32, %arg1: i32, %arg2: memref<1x16x128xbf16, #tpu.memory_space<vmem>>, %arg3: memref<128x128xbf16, #tpu.memory_space<vmem>>, %arg4: memref<1x16x16xf32, #tpu.memory_space<vmem>>, %arg5: memref<1x16x128xbf16, #tpu.memory_space<vmem>>, %arg6: memref<1x16x1xf32, #tpu.memory_space<vmem>>, %arg7: memref<1x1x16xf32, #tpu.memory_space<vmem>>) attributes {dimension_semantics = [#tpu.dimension_semantics<parallel>, #tpu.dimension_semantics<arbitrary>], iteration_bounds = array<i64: 2, 1>, scalar_prefetch = 0 : i64, scratch_operands = 3 : i64, tpu.core_type = #tpu.core_type<tc>, window_params = [{transform_indices = @transform_0, window_bounds = array<i64: 1, 16, 128>}, {pipeline_mode = #tpu.pipeline_mode<synchronous>, transform_indices = @transform_1, window_bounds = array<i64: 128, 128>}, {transform_indices = @transform_2, window_bounds = array<i64: 1, 16, 16>}]} {
    %c0_i32 = arith.constant 0 : i32
    %0 = arith.cmpi eq, %arg1, %c0_i32 : i32
    %1 = arith.extui %0 : i1 to i32
    %c0_i32_0 = arith.constant 0 : i32
    %2 = arith.cmpi ne, %1, %c0_i32_0 : i32
    scf.if %2 {
      %c0_13 = arith.constant 0 : index
      %c0_14 = arith.constant 0 : index
      %c0_15 = arith.constant 0 : index
      %17 = vector.load %arg2[%c0_13, %c0_14, %c0_15] : memref<1x16x128xbf16, #tpu.memory_space<vmem>>, vector<1x16x128xbf16>
      %c0_16 = arith.constant 0 : index
      %c0_17 = arith.constant 0 : index
      %18 = vector.load %arg3[%c0_16, %c0_17] : memref<128x128xbf16, #tpu.memory_space<vmem>>, vector<128x128xbf16>
      %19 = vector.shape_cast %17 : vector<1x16x128xbf16> to vector<16x128xbf16>
      %cst_18 = arith.constant dense<0.000000e+00> : vector<16x128xf32>
      %20 = tpu.matmul %19, %18, %cst_18 {dimension_numbers = #tpu.dot_dimension_numbers<[1], [0], [0], [1], [0, 0, 1, 1], [], []>} : vector<16x128xbf16>, vector<128x128xbf16>, vector<16x128xf32> -> vector<16x128xf32>
      %21 = vector.shape_cast %20 : vector<16x128xf32> to vector<1x16x128xf32>
      %22 = arith.truncf %21 : vector<1x16x128xf32> to vector<1x16x128xbf16>
      %c0_19 = arith.constant 0 : index
      %c0_20 = arith.constant 0 : index
      %c0_21 = arith.constant 0 : index
      %23 = vector.load %arg5[%c0_19, %c0_20, %c0_21] : memref<1x16x128xbf16, #tpu.memory_space<vmem>>, vector<1x16x128xbf16>
      tpu.vector_store %arg5[%c0_19, %c0_20, %c0_21], %22 {strides = array<i32>} : memref<1x16x128xbf16, #tpu.memory_space<vmem>>, vector<1x16x128xbf16>,
      %24 = arith.extf %22 : vector<1x16x128xbf16> to vector<1x16x128xf32>
      %25 = arith.extf %17 : vector<1x16x128xbf16> to vector<1x16x128xf32>
      %26 = arith.mulf %24, %25 : vector<1x16x128xf32>
      %cst_22 = arith.constant dense<0.000000e+00> : vector<1x16xf32>
      %27 = vector.multi_reduction <add>, %26, %cst_22 [2] : vector<1x16x128xf32> to vector<1x16xf32>
      %cst_23 = arith.constant 5.000000e-01 : f32
      %28 = vector.broadcast %cst_23 : f32 to vector<1x16xf32>
      %29 = arith.mulf %28, %27 : vector<1x16xf32>
      %30 = vector.shape_cast %29 : vector<1x16xf32> to vector<1x16x1xf32>
      %c0_24 = arith.constant 0 : index
      %c0_25 = arith.constant 0 : index
      %c0_26 = arith.constant 0 : index
      %31 = vector.load %arg6[%c0_24, %c0_25, %c0_26] : memref<1x16x1xf32, #tpu.memory_space<vmem>>, vector<1x16x1xf32>
      tpu.vector_store %arg6[%c0_24, %c0_25, %c0_26], %30 {strides = array<i32>} : memref<1x16x1xf32, #tpu.memory_space<vmem>>, vector<1x16x1xf32>,
      %32 = vector.shape_cast %29 : vector<1x16xf32> to vector<1x1x16xf32>
      %c0_27 = arith.constant 0 : index
      %c0_28 = arith.constant 0 : index
      %c0_29 = arith.constant 0 : index
      %33 = vector.load %arg7[%c0_27, %c0_28, %c0_29] : memref<1x1x16xf32, #tpu.memory_space<vmem>>, vector<1x1x16xf32>
      tpu.vector_store %arg7[%c0_27, %c0_28, %c0_29], %32 {strides = array<i32>} : memref<1x1x16xf32, #tpu.memory_space<vmem>>, vector<1x1x16xf32>,
    } else {
    }
    %c16_i32 = arith.constant 16 : i32
    %3 = arith.muli %arg1, %c16_i32 : i32
    %4 = tpu.assume_multiple %3, 16 : i32
    %c0 = arith.constant 0 : index
    %5 = arith.index_cast %4 : i32 to index
    %c0_1 = arith.constant 0 : index
    %6 = vector.load %arg5[%c0, %5, %c0_1] : memref<1x16x128xbf16, #tpu.memory_space<vmem>>, vector<1x16x128xbf16>
    %c0_2 = arith.constant 0 : index
    %c0_3 = arith.constant 0 : index
    %c0_4 = arith.constant 0 : index
    %7 = vector.load %arg2[%c0_2, %c0_3, %c0_4] : memref<1x16x128xbf16, #tpu.memory_space<vmem>>, vector<1x16x128xbf16>
    %cst = arith.constant dense<0.000000e+00> : vector<1x16x16xf32>
    %8 = tpu.matmul %6, %7, %cst {dimension_numbers = #tpu.dot_dimension_numbers<[2], [2], [1], [1], [0, 0, 0, 1, 1, 1], [0], [0]>} : vector<1x16x128xbf16>, vector<1x16x128xbf16>, vector<1x16x16xf32> -> vector<1x16x16xf32>
    %c0_5 = arith.constant 0 : index
    %9 = arith.index_cast %4 : i32 to index
    %c0_6 = arith.constant 0 : index
    %10 = vector.load %arg6[%c0_5, %9, %c0_6] : memref<1x16x1xf32, #tpu.memory_space<vmem>>, vector<1x16x1xf32>
    %c0_7 = arith.constant 0 : index
    %c0_8 = arith.constant 0 : index
    %c0_9 = arith.constant 0 : index
    %11 = vector.load %arg7[%c0_7, %c0_8, %c0_9] : memref<1x1x16xf32, #tpu.memory_space<vmem>>, vector<1x1x16xf32>
    %12 = vector.broadcast %10 : vector<1x16x1xf32> to vector<1x16x16xf32>
    %13 = vector.broadcast %11 : vector<1x1x16xf32> to vector<1x16x16xf32>
    %14 = arith.addf %12, %13 : vector<1x16x16xf32>
    %15 = arith.subf %14, %8 : vector<1x16x16xf32>
    %c0_10 = arith.constant 0 : index
    %c0_11 = arith.constant 0 : index
    %c0_12 = arith.constant 0 : index
    %16 = vector.load %arg4[%c0_10, %c0_11, %c0_12] : memref<1x16x16xf32, #tpu.memory_space<vmem>>, vector<1x16x16xf32>
    tpu.vector_store %arg4[%c0_10, %c0_11, %c0_12], %15 {strides = array<i32>} : memref<1x16x16xf32, #tpu.memory_space<vmem>>, vector<1x16x16xf32>,
    return
  }
  func.func @transform_0(%arg0: i32, %arg1: i32) -> (i32, i32, i32) {
    %c0_i32 = arith.constant 0 : i32
    %c0_i32_0 = arith.constant 0 : i32
    %c0_i32_1 = arith.constant 0 : i32
    return %arg0, %c0_i32, %c0_i32_0 : i32, i32, i32
  }
  func.func @transform_1(%arg0: i32, %arg1: i32) -> (i32, i32) {
    %c0_i32 = arith.constant 0 : i32
    %c0_i32_0 = arith.constant 0 : i32
    %c0_i32_1 = arith.constant 0 : i32
    return %c0_i32, %c0_i32_0 : i32, i32
  }
  func.func @transform_2(%arg0: i32, %arg1: i32) -> (i32, i32, i32) {
    %c0_i32 = arith.constant 0 : i32
    %c0_i32_0 = arith.constant 0 : i32
    return %arg0, %arg1, %c0_i32 : i32, i32, i32
  }
}

module attributes {stable_mosaic.version = 11 : i64} {
  func.func @kernel(%arg0: i32, %arg1: i32, %arg2: memref<1x16x128xbf16, #tpu.memory_space<vmem>>, %arg3: memref<128x128xbf16, #tpu.memory_space<vmem>>, %arg4: memref<1x16x16xf32, #tpu.memory_space<vmem>>, %arg5: memref<1x16x128xbf16, #tpu.memory_space<vmem>>, %arg6: memref<1x16x1xf32, #tpu.memory_space<vmem>>, %arg7: memref<1x1x16xf32, #tpu.memory_space<vmem>>) attributes {dimension_semantics = [#tpu.dimension_semantics<parallel>, #tpu.dimension_semantics<arbitrary>], iteration_bounds = array<i64: 2, 1>, scalar_prefetch = 0 : i64, scratch_operands = 3 : i64, tpu.core_type = #tpu.core_type<tc>, window_params = [{transform_indices = @transform_0, window_bounds = array<i64: 1, 16, 128>}, {pipeline_mode = #tpu.pipeline_mode<synchronous>, transform_indices = @transform_1, window_bounds = array<i64: 128, 128>}, {transform_indices = @transform_2, window_bounds = array<i64: 1, 16, 16>}]} {
    %c0_i32 = arith.constant 0 : i32
    %0 = arith.cmpi eq, %arg1, %c0_i32 : i32
    %1 = arith.extui %0 : i1 to i32
    %c0_i32_0 = arith.constant 0 : i32
    %2 = arith.cmpi ne, %1, %c0_i32_0 : i32
    scf.if %2 {
      %c0_13 = arith.constant 0 : index
      %c0_14 = arith.constant 0 : index
      %c0_15 = arith.constant 0 : index
      %17 = vector.load %arg2[%c0_13, %c0_14, %c0_15] : memref<1x16x128xbf16, #tpu.memory_space<vmem>>, vector<1x16x128xbf16>
      %c0_16 = arith.constant 0 : index
      %c0_17 = arith.constant 0 : index
      %18 = vector.load %arg3[%c0_16, %c0_17] : memref<128x128xbf16, #tpu.memory_space<vmem>>, vector<128x128xbf16>
      %19 = vector.shape_cast %17 : vector<1x16x128xbf16> to vector<16x128xbf16>
      %cst_18 = arith.constant dense<0.000000e+00> : vector<16x128xf32>
      %20 = tpu.matmul %19, %18, %cst_18 {dimension_numbers = #tpu.dot_dimension_numbers<[1], [0], [0], [1], [0, 0, 1, 1], [], []>} : vector<16x128xbf16>, vector<128x128xbf16>, vector<16x128xf32> -> vector<16x128xf32>
      %21 = vector.shape_cast %20 : vector<16x128xf32> to vector<1x16x128xf32>
      %22 = arith.truncf %21 : vector<1x16x128xf32> to vector<1x16x128xbf16>
      %c0_19 = arith.constant 0 : index
      %c0_20 = arith.constant 0 : index
      %c0_21 = arith.constant 0 : index
      %23 = vector.load %arg5[%c0_19, %c0_20, %c0_21] : memref<1x16x128xbf16, #tpu.memory_space<vmem>>, vector<1x16x128xbf16>
      tpu.vector_store %arg5[%c0_19, %c0_20, %c0_21], %22 {strides = array<i32>} : memref<1x16x128xbf16, #tpu.memory_space<vmem>>, vector<1x16x128xbf16>,
      %24 = arith.extf %22 : vector<1x16x128xbf16> to vector<1x16x128xf32>
      %25 = arith.extf %17 : vector<1x16x128xbf16> to vector<1x16x128xf32>
      %26 = arith.mulf %24, %25 : vector<1x16x128xf32>
      %cst_22 = arith.constant dense<0.000000e+00> : vector<1x16xf32>
      %27 = vector.multi_reduction <add>, %26, %cst_22 [2] : vector<1x16x128xf32> to vector<1x16xf32>
      %cst_23 = arith.constant 5.000000e-01 : f32
      %28 = vector.broadcast %cst_23 : f32 to vector<1x16xf32>
      %29 = arith.mulf %28, %27 : vector<1x16xf32>
      %30 = vector.shape_cast %29 : vector<1x16xf32> to vector<1x16x1xf32>
      %c0_24 = arith.constant 0 : index
      %c0_25 = arith.constant 0 : index
      %c0_26 = arith.constant 0 : index
      %31 = vector.load %arg6[%c0_24, %c0_25, %c0_26] : memref<1x16x1xf32, #tpu.memory_space<vmem>>, vector<1x16x1xf32>
      tpu.vector_store %arg6[%c0_24, %c0_25, %c0_26], %30 {strides = array<i32>} : memref<1x16x1xf32, #tpu.memory_space<vmem>>, vector<1x16x1xf32>,
      %32 = vector.shape_cast %29 : vector<1x16xf32> to vector<1x1x16xf32>
      %c0_27 = arith.constant 0 : index
      %c0_28 = arith.constant 0 : index
      %c0_29 = arith.constant 0 : index
      %33 = vector.load %arg7[%c0_27, %c0_28, %c0_29] : memref<1x1x16xf32, #tpu.memory_space<vmem>>, vector<1x1x16xf32>
      tpu.vector_store %arg7[%c0_27, %c0_28, %c0_29], %32 {strides = array<i32>} : memref<1x1x16xf32, #tpu.memory_space<vmem>>, vector<1x1x16xf32>,
    } else {
    }
    %c16_i32 = arith.constant 16 : i32
    %3 = arith.muli %arg1, %c16_i32 : i32
    %4 = tpu.assume_multiple %3, 16 : i32
    %c0 = arith.constant 0 : index
    %5 = arith.index_cast %4 : i32 to index
    %c0_1 = arith.constant 0 : index
    %6 = vector.load %arg5[%c0, %5, %c0_1] : memref<1x16x128xbf16, #tpu.memory_space<vmem>>, vector<1x16x128xbf16>
    %c0_2 = arith.constant 0 : index
    %c0_3 = arith.constant 0 : index
    %c0_4 = arith.constant 0 : index
    %7 = vector.load %arg2[%c0_2, %c0_3, %c0_4] : memref<1x16x128xbf16, #tpu.memory_space<vmem>>, vector<1x16x128xbf16>
    %cst = arith.constant dense<0.000000e+00> : vector<1x16x16xf32>
    %8 = tpu.matmul %6, %7, %cst {dimension_numbers = #tpu.dot_dimension_numbers<[2], [2], [1], [1], [0, 0, 0, 1, 1, 1], [0], [0]>} : vector<1x16x128xbf16>, vector<1x16x128xbf16>, vector<1x16x16xf32> -> vector<1x16x16xf32>
    %c0_5 = arith.constant 0 : index
    %9 = arith.index_cast %4 : i32 to index
    %c0_6 = arith.constant 0 : index
    %10 = vector.load %arg6[%c0_5, %9, %c0_6] : memref<1x16x1xf32, #tpu.memory_space<vmem>>, vector<1x16x1xf32>
    %c0_7 = arith.constant 0 : index
    %c0_8 = arith.constant 0 : index
    %c0_9 = arith.constant 0 : index
    %11 = vector.load %arg7[%c0_7, %c0_8, %c0_9] : memref<1x1x16xf32, #tpu.memory_space<vmem>>, vector<1x1x16xf32>
    %12 = vector.broadcast %10 : vector<1x16x1xf32> to vector<1x16x16xf32>
    %13 = vector.broadcast %11 : vector<1x1x16xf32> to vector<1x16x16xf32>
    %14 = arith.addf %12, %13 : vector<1x16x16xf32>
    %15 = arith.subf %14, %8 : vector<1x16x16xf32>
    %c0_10 = arith.constant 0 : index
    %c0_11 = arith.constant 0 : index
    %c0_12 = arith.constant 0 : index
    %16 = vector.load %arg4[%c0_10, %c0_11, %c0_12] : memref<1x16x16xf32, #tpu.memory_space<vmem>>, vector<1x16x16xf32>
    tpu.vector_store %arg4[%c0_10, %c0_11, %c0_12], %15 {strides = array<i32>} : memref<1x16x16xf32, #tpu.memory_space<vmem>>, vector<1x16x16xf32>,
    return
  }
  func.func @transform_0(%arg0: i32, %arg1: i32) -> (i32, i32, i32) {
    %c0_i32 = arith.constant 0 : i32
    %c0_i32_0 = arith.constant 0 : i32
    %c0_i32_1 = arith.constant 0 : i32
    return %arg0, %c0_i32, %c0_i32_0 : i32, i32, i32
  }
  func.func @transform_1(%arg0: i32, %arg1: i32) -> (i32, i32) {
    %c0_i32 = arith.constant 0 : i32
    %c0_i32_0 = arith.constant 0 : i32
    %c0_i32_1 = arith.constant 0 : i32
    return %c0_i32, %c0_i32_0 : i32, i32
  }
  func.func @transform_2(%arg0: i32, %arg1: i32) -> (i32, i32, i32) {
    %c0_i32 = arith.constant 0 : i32
    %c0_i32_0 = arith.constant 0 : i32
    return %arg0, %arg1, %c0_i32 : i32, i32, i32
  }
}

</mosaic_0001>

<llo_original>
// kernel: tpu_custom_call.1
$region0: #{tpu_custom_call.1}
  #allocation0 [shape = 'u32[]', space=smem, size = 0x4, offset = 0x4, fixed_abs, tag = 'smem constant byte address 0x4 - core index']
  #allocation1 [shape = 'u32[72,128]{1,0:T(1,128)}', space=vmem, size = 0x9000, scoped, tag = 'internal scratch']
  #allocation2 [shape = 'bf16[1,16,128]{2,1,0:T(8,128)(2,1)}', space=vmem, size = 0x1000, scoped, tag = 'scratch operand']
  #allocation3 [shape = 'f32[1,16,1]{2,1,0:T(8,128)}', space=vmem, size = 0x2000, scoped, tag = 'scratch operand']
  #allocation4 [shape = 'f32[1,1,16]{2,1,0:T(1,128)}', space=vmem, size = 0x200, scoped, tag = 'scratch operand']
  %s0 = inlined_call_operand.hbm [shape: bf16[2,16,128], index: 0, kind: input, shape index: {}]
  %s1 = inlined_call_operand.hbm [shape: bf16[128,128], index: 1, kind: input, shape index: {}]
  %s2 = inlined_call_operand.hbm [shape: f32[2,16,16], index: 2, kind: output, shape index: {}]
  %s3 = sld [smem:[#allocation0]]
  $region53: #{tpu_custom_call.1} parent=0
    _
  %s5 = ssub.s32 1, %s3
  %s6 = scalar_select 0, %s5, %s3
  $region1: #{tpu_custom_call.1} parent=0
    #allocation5 [shape = 'u8[8192]{0}', space=vmem, size = 0x2000, scoped, tag = 'input window, operand 0']
    #allocation6 [shape = 's32[2]{0}', space=sflag, size = 0x8, scoped, tag = 'scoped memory for tpu_custom_call.1']
    #allocation7 [shape = 's32[2]{0}', space=sflag, size = 0x8, scoped, tag = 'scoped memory for tpu_custom_call.1']
    #allocation8 [shape = 'u8[32768]{0}', space=vmem, size = 0x8000, scoped, tag = 'input window, operand 1, single buffered']
    #allocation9 [shape = 's32[1]{0}', space=sflag, size = 0x4, scoped, tag = 'scoped memory for tpu_custom_call.1']
    #allocation10 [shape = 'u8[16384]{0}', space=vmem, size = 0x4000, scoped, tag = 'output window, operand 0']
    %7 = vsyncpa [#allocation6], 0
    %s8 = scalar_lea.sflag [#allocation6], 1
    %9 = vsyncpa %s8, 0
    %10 = vsyncpa [#allocation9], 0
    %11 = vsyncpa [#allocation7], 0
    %s12 = scalar_lea.sflag [#allocation7], 1
    %13 = vsyncpa %s12, 0
    loop: start=0, step=1, limit=4
    $region2: #{tpu_custom_call.1} parent=1 // loop_pre_header
      _
    $region3: #{tpu_custom_call.1} parent=1 // loop_header
      %s15 = sphi 0, %s19
      %p16 = scmp.ge.s32.totalorder %s15, 4
      %s22 = sphi 0, %s34
      %s23 = sphi 0, %s30
      %s24 = sphi 0, %s22
      %s25 = sphi 0, %s23
      %s26 = sphi 0, %s24
      %s27 = sphi 0, %s25
      %s37 = sphi 0, %s39
      %s40 = sphi 0, %s37
      %s41 = sphi 0, %s40
      %s57 = sphi 0, %s41
      %s61 = sphi 0, %s61
      %s63 = sphi 0, %s61
      %s64 = sphi 0, %s63
      %s78 = sphi 0, %s64
      %s86 = sphi 0, %s88
      %s89 = sphi 0, %s86
      %s90 = sphi 0, %s89
      %s106 = sphi 0, %s90
    $region4: #{tpu_custom_call.1} parent=1 // loop_header_branch
      %18 = sbr.rel (%p16) target = $region8
    $region5: #{tpu_custom_call.1} parent=1 // loop_body
      %s20 = ssub.s32 %s15, 1
      %s21 = ssub.s32 %s15, 2
      %s28 = sadd.s32 1, %s23
      %p29 = scmp.ge.s32.totalorder %s28, 1
      %s30 = scalar_select %p29, 0, %s28
      %s31 = sadd.s32 1, %s22
      %s32 = scalar_select %p29, %s31, %s22
      %p33 = scmp.ge.s32.totalorder %s32, 2
      %s34 = scalar_select %p33, 0, %s32
      %s35 = ssub.s32 %s22, %s34
      %p36 = scmp.eq.s32.totalorder %s35, 0
      %s38 = sadd.s32 %s37, 1
      %s39 = scalar_select %p36, %s37, %s38
      %p42 = pneg %p36
      %p43 = scmp.eq.s32.totalorder %s15, 1
      %p44 = por %p42, %p43
      %p45 = scmp.ne.s32.totalorder %s37, %s40
      %p46 = scmp.eq.s32.totalorder %s15, 0
      %p47 = por %p45, %p46
      %p48 = scmp.ne.s32.totalorder %s37, %s40
      %p49 = scmp.eq.s32.totalorder %s20, 1
      %p50 = por %p48, %p49
      %p51 = scmp.ne.s32.totalorder %s40, %s41
      %p52 = scmp.eq.s32.totalorder %s20, 0
      %p53 = por %p51, %p52
      %p54 = scmp.ne.s32.totalorder %s40, %s41
      %p55 = scmp.eq.s32.totalorder %s21, 1
      %p56 = por %p54, %p55
      %p58 = scmp.ne.s32.totalorder %s41, %s57
      %p59 = scmp.eq.s32.totalorder %s21, 0
      %p60 = por %p58, %p59
      %s62 = sadd.s32 %s61, 1
      %p65 = scmp.eq.s32.totalorder %s15, 1
      %p66 = scmp.ne.s32.totalorder %s61, %s63
      %p67 = scmp.eq.s32.totalorder %s15, 0
      %p68 = por %p66, %p67
      %p69 = scmp.ne.s32.totalorder %s61, %s63
      %p70 = scmp.eq.s32.totalorder %s20, 1
      %p71 = por %p69, %p70
      %p72 = scmp.ne.s32.totalorder %s63, %s64
      %p73 = scmp.eq.s32.totalorder %s20, 0
      %p74 = por %p72, %p73
      %p75 = scmp.ne.s32.totalorder %s63, %s64
      %p76 = scmp.eq.s32.totalorder %s21, 1
      %p77 = por %p75, %p76
      %p79 = scmp.ne.s32.totalorder %s64, %s78
      %p80 = scmp.eq.s32.totalorder %s21, 0
      %p81 = por %p79, %p80
      %s82 = ssub.s32 %s22, %s34
      %s83 = ssub.s32 %s23, %s30
      %s84 = sor.u32 %s82, %s83
      %p85 = scmp.eq.s32.totalorder %s84, 0
      %s87 = sadd.s32 %s86, 1
      %s88 = scalar_select %p85, %s86, %s87
      %p91 = pneg %p85
      %p92 = scmp.eq.s32.totalorder %s15, 1
      %p93 = por %p91, %p92
      %p94 = scmp.ne.s32.totalorder %s86, %s89
      %p95 = scmp.eq.s32.totalorder %s15, 0
      %p96 = por %p94, %p95
      %p97 = scmp.ne.s32.totalorder %s86, %s89
      %p98 = scmp.eq.s32.totalorder %s20, 1
      %p99 = por %p97, %p98
      %p100 = scmp.ne.s32.totalorder %s89, %s90
      %p101 = scmp.eq.s32.totalorder %s20, 0
      %p102 = por %p100, %p101
      %p103 = scmp.ne.s32.totalorder %s89, %s90
      %p104 = scmp.eq.s32.totalorder %s21, 1
      %p105 = por %p103, %p104
      %p107 = scmp.ne.s32.totalorder %s90, %s106
      %p108 = scmp.eq.s32.totalorder %s21, 0
      %p109 = por %p107, %p108
      %p110 = scmp.le.s32.totalorder 1, %s15
      %p111 = scmp.lt.s32.totalorder %s15, 3
      %p112 = pnand %p110, %p111
      %p113 = pneg %p112
      // Predicated region
      $region9: #{tpu_custom_call.1} parent=5 // pred_check
        _
      $region10: #{tpu_custom_call.1} parent=5 // pred_check_branch
        %115 = sbr.rel (%p112) target = $region12
      $region11: #{tpu_custom_call.1} parent=5 // pred_region
        %s116 = ssub.s32 %s15, 1
        // Predicated region
        $region13: #{tpu_custom_call.1} parent=11 // pred_check
          %p117 = pneg %p74
        $region14: #{tpu_custom_call.1} parent=11 // pred_check_branch
          %119 = sbr.rel (%p117) target = $region16
        $region15: #{tpu_custom_call.1} parent=11 // pred_region
          %121 = vsyncadd [#allocation9], 0
          %s122 = sshll.u32 %s1, 4
          %s123 = int_to_ptr.hbm [resolvable:$true] %s122
          %s124 = sshll.u32 [#allocation8], 4
          %s125 = int_to_ptr.vmem [resolvable:$true] %s124
          %130 = dma.hbm_to_vmem [thread:$0]  %s123, 1024, %s125, [#allocation9], 64, 64, 4
        $region16: #{tpu_custom_call.1} parent=11 // pred_fallthru
          _
      $region12: #{tpu_custom_call.1} parent=5 // pred_fallthru
        _
      %p131 = scmp.lt.s32.totalorder %s15, 2
      // Predicated region
      $region17: #{tpu_custom_call.1} parent=5 // pred_check
        %p132 = pneg %p131
      $region18: #{tpu_custom_call.1} parent=5 // pred_check_branch
        %134 = sbr.rel (%p132) target = $region20
      $region19: #{tpu_custom_call.1} parent=5 // pred_region
        // Predicated region
        $region21: #{tpu_custom_call.1} parent=19 // pred_check
          %p135 = pneg %p47
        $region22: #{tpu_custom_call.1} parent=19 // pred_check_branch
          %137 = sbr.rel (%p135) target = $region24
        $region23: #{tpu_custom_call.1} parent=19 // pred_region
          %s138 = sand.u32 %s37, 1
          %s139 = scalar_lea.sflag [#allocation6], %s138
          %s140 = sand.u32 %s37, 1
          %s141 = smul.addr %s140, 8
          %s142 = scalar_lea.vmem [#allocation5], %s141
          %144 = vsyncadd %s139, 0
          %s145 = smul.addr %s22, 2
          %s146 = smul.addr %s145, 4
          %s147 = scalar_lea.hbm %s0, %s146
          %s148 = sshll.u32 %s147, 4
          %s149 = int_to_ptr.hbm [resolvable:$true] %s148
          %s150 = sshll.u32 %s142, 4
          %s151 = int_to_ptr.vmem [resolvable:$true] %s150
          %156 = dma.hbm_to_vmem [thread:$0]  %s149, 128, %s151, %s139, 64, 64, 4
        $region24: #{tpu_custom_call.1} parent=19 // pred_fallthru
          _
      $region20: #{tpu_custom_call.1} parent=5 // pred_fallthru
        _
      %p157 = scmp.le.s32.totalorder 1, %s15
      %p158 = scmp.lt.s32.totalorder %s15, 3
      %p159 = pnand %p157, %p158
      %p160 = pneg %p159
      // Predicated region
      $region25: #{tpu_custom_call.1} parent=5 // pred_check
        _
      $region26: #{tpu_custom_call.1} parent=5 // pred_check_branch
        %162 = sbr.rel (%p159) target = $region28
      $region27: #{tpu_custom_call.1} parent=5 // pred_region
        %s163 = ssub.s32 %s15, 1
        %s164 = sand.u32 %s40, 1
        %s165 = scalar_lea.sflag [#allocation6], %s164
        %s166 = sand.u32 %s40, 1
        %s167 = smul.addr %s166, 8
        %s168 = scalar_lea.vmem [#allocation5], %s167
        // Predicated region
        $region29: #{tpu_custom_call.1} parent=27 // pred_check
          %p169 = pneg %p53
        $region30: #{tpu_custom_call.1} parent=27 // pred_check_branch
          %171 = sbr.rel (%p169) target = $region32
        $region31: #{tpu_custom_call.1} parent=27 // pred_region
          %173 = dma.done %s165, 128
        $region32: #{tpu_custom_call.1} parent=27 // pred_fallthru
          _
        // Predicated region
        $region33: #{tpu_custom_call.1} parent=27 // pred_check
          %p174 = pneg %p74
        $region34: #{tpu_custom_call.1} parent=27 // pred_check_branch
          %176 = sbr.rel (%p174) target = $region36
        $region35: #{tpu_custom_call.1} parent=27 // pred_region
          %178 = dma.done [#allocation9], 1024
        $region36: #{tpu_custom_call.1} parent=27 // pred_fallthru
          _
        %s179 = sand.u32 %s40, 1
        %s180 = scalar_lea.sflag [#allocation6], %s179
        %s181 = sand.u32 %s40, 1
        %s182 = smul.addr %s181, 8
        %s183 = scalar_lea.vmem [#allocation5], %s182
        %p184 = pneg %p53
        %p185 = pneg %p50
        %p186 = pneg %p74
        %p187 = pneg %p71
        %p188 = pneg %p102
        %p189 = pneg %p99
        %s190 = sand.u32 %s89, 1
        %s191 = scalar_lea.sflag [#allocation7], %s190
        %s192 = sand.u32 %s89, 1
        %s193 = smul.addr %s192, 16
        %s194 = scalar_lea.vmem [#allocation10], %s193
        %s195 = smul.u32 2, %s25
        %p197 = scmp.eq.s32.totalorder %s25, 0
        // Predicated region
        $region37: #{tpu_custom_call.1} parent=27 // pred_check
          %p198 = pneg %p197
        $region38: #{tpu_custom_call.1} parent=27 // pred_check_branch
          %200 = sbr.rel (%p198) target = $region40
        $region39: #{tpu_custom_call.1} parent=27 // pred_region
          %v201 = vld [vmem:[%s168] sm:$0xf]
          %v202 = vld [vmem:[%s168 + $0x4] sm:$0xf]
          %v203 = vld [vmem:[#allocation8] sm:$0xf]
          %v204 = vld [vmem:[#allocation8 + $0x4] sm:$0xf]
          %v205 = vld [vmem:[#allocation8 + $0x8] sm:$0xf]
          %v206 = vld [vmem:[#allocation8 + $0xc] sm:$0xf]
          %v207 = vld [vmem:[#allocation8 + $0x10] sm:$0xf]
          %v208 = vld [vmem:[#allocation8 + $0x14] sm:$0xf]
          %v209 = vld [vmem:[#allocation8 + $0x18] sm:$0xf]
          %v210 = vld [vmem:[#allocation8 + $0x1c] sm:$0xf]
          %v211 = vld [vmem:[#allocation8 + $0x20] sm:$0xf]
          %v212 = vld [vmem:[#allocation8 + $0x24] sm:$0xf]
          %v213 = vld [vmem:[#allocation8 + $0x28] sm:$0xf]
          %v214 = vld [vmem:[#allocation8 + $0x2c] sm:$0xf]
          %v215 = vld [vmem:[#allocation8 + $0x30] sm:$0xf]
          %v216 = vld [vmem:[#allocation8 + $0x34] sm:$0xf]
          %v217 = vld [vmem:[#allocation8 + $0x38] sm:$0xf]
          %v218 = vld [vmem:[#allocation8 + $0x3c] sm:$0xf]
          %v221 = vunpack.c.l.b16 %v201
          %v222 = vunpack.c.l.b16 %v202
          %v223 = vpack.c.b16 %v222, %v221
          %v241 = vunpack.c.l.b16 %v203
          %v242 = vunpack.c.l.b16 %v204
          %v243 = vunpack.c.l.b16 %v205
          %v244 = vunpack.c.l.b16 %v206
          %v245 = vunpack.c.l.b16 %v207
          %v246 = vunpack.c.l.b16 %v208
          %v247 = vunpack.c.l.b16 %v209
          %v248 = vunpack.c.l.b16 %v210
          %v249 = vunpack.c.l.b16 %v211
          %v250 = vunpack.c.l.b16 %v212
          %v251 = vunpack.c.l.b16 %v213
          %v252 = vunpack.c.l.b16 %v214
          %v253 = vunpack.c.l.b16 %v215
          %v254 = vunpack.c.l.b16 %v216
          %v255 = vunpack.c.l.b16 %v217
          %v256 = vunpack.c.l.b16 %v218
          %v257 = vpack.c.b16 %v242, %v241
          %v258 = vpack.c.b16 %v244, %v243
          %v259 = vpack.c.b16 %v246, %v245
          %v260 = vpack.c.b16 %v248, %v247
          %v261 = vpack.c.b16 %v250, %v249
          %v262 = vpack.c.b16 %v252, %v251
          %v263 = vpack.c.b16 %v254, %v253
          %v264 = vpack.c.b16 %v256, %v255
          %273 = vmatpush.bf16.msra.mxu0 %v264
          %274 = vmatpush.bf16.msra.mxu0 %v263
          %275 = vmatpush.bf16.msra.mxu0 %v262
          %276 = vmatpush.bf16.msra.mxu0 %v261
          %277 = vmatpush.bf16.msra.mxu0 %v260
          %278 = vmatpush.bf16.msra.mxu0 %v259
          %279 = vmatpush.bf16.msra.mxu0 %v258
          %280 = vmatpush.bf16.msra.mxu0 %v257
          %281 = vmatmul.bf16.gmra.mxu0 %v223
          %v282 = vpop.f32.mrf.mxu0
          %v283 = vadd.f32 0.0, %v282
          %v284 = vpop.f32.mrf.mxu0
          %v285 = vadd.f32 0.0, %v284
          %286 = vdwg.mxu0
          %v287 = vpack.c.bf16 %v283, %v283
          %v288 = vpack.c.bf16 %v285, %v285
          %289 = vst [vmem:[#allocation2] sm:$0xf] %v287
          %290 = vst [vmem:[#allocation2 + $0x4] sm:$0xf] %v288
          %v291 = vunpack.c.l.bf16 %v287
          %v292 = vunpack.c.l.bf16 %v288
          %v293 = vunpack.c.l.bf16 %v201
          %v294 = vunpack.c.l.bf16 %v202
          %v295 = vmul.f32 %v291, %v293
          %v296 = vmul.f32 %v292, %v294
          %297 = vadd.xlane.f32.xlu0 %v295
          %v298 = vpop.xlane.xlu0 %297
          %299 = vadd.xlane.f32.xlu0 %v296
          %v300 = vpop.xlane.xlu0 %299
          %v301 = vmul.f32 %v298, 0.5
          %v302 = vmul.f32 %v300, 0.5
          %vm303 = vcmask 7168
          %304 = vst.msk [vmem:[#allocation3] sm:$0xff] %vm303, %v301
          %305 = vst.msk [vmem:[#allocation3 + $0x8] sm:$0xff] %vm303, %v302
          %v308 = vlaneseq
          %v309 = vand.u32 %v308, 127
          %v310 = vperm.slane %v301, %v309
          %v311 = vadd.s32 %v309, 4294967288
          %v312 = vperm.slane %v302, %v311
          %vm313 = vcmask 130112
          %v314 = vsel %vm313, %v312, %v310
          %vm316 = vcmask 122880
          %317 = vst.msk [vmem:[#allocation4] sm:$0x1] %vm316, %v314
        $region40: #{tpu_custom_call.1} parent=27 // pred_fallthru
          _
        %s318 = smul.u32 %s25, 16
        %s319 = sshra.s32 %s318, 3
        %s320 = sand.u32 %s318, 7
        %s321 = smul.addr %s319, 4
        %s322 = scalar_lea.vmem [#allocation2], %s321
        %v323 = vld [vmem:[%s322] sm:$0xf]
        %v324 = vld [vmem:[%s322 + $0x4] sm:$0xf]
        %v325 = vld [vmem:[%s168] sm:$0xf]
        %v326 = vld [vmem:[%s168 + $0x4] sm:$0xf]
        %v329 = vunpack.c.l.b16 %v323
        %v330 = vunpack.c.l.b16 %v324
        %v331 = vpack.c.b16 %v330, %v329
        %v335 = vunpack.c.l.b16 %v325
        %v336 = vunpack.c.l.b16 %v326
        %v337 = vpack.c.b16 %v336, %v335
        %339 = vmatpush.bf16.xpose.msra.mxu0 0
        %340 = vmatpush.bf16.xpose.msra.mxu0 0
        %341 = vmatpush.bf16.xpose.msra.mxu0 0
        %342 = vmatpush.bf16.xpose.msra.mxu0 0
        %343 = vmatpush.bf16.xpose.msra.mxu0 0
        %344 = vmatpush.bf16.xpose.msra.mxu0 0
        %345 = vmatpush.bf16.xpose.msra.mxu0 0
        %346 = vmatpush.bf16.xpose.msra.mxu0 %v337
        %347 = vmatmul.bf16.gmra.mxu0 %v331
        %v348 = vpop.f32.mrf.mxu0
        %v349 = vadd.f32 0.0, %v348
        %v350 = vpop.f32.mrf.mxu0
        %v351 = vadd.f32 0.0, %v350
        %352 = vdwg.mxu0
        %s353 = scalar_lea.vmem [#allocation3], %s318
        %v354 = vld [vmem:[%s353] sm:$0xff]
        %v355 = vld [vmem:[%s353 + $0x8] sm:$0xff]
        %v356 = vld [vmem:[#allocation4] sm:$0x1]
        %358 = vset.pattern.permute.xlu0 0
        %359 = vperm.xlu0 %358, %v354
        %v360 = vpop.permute.xlu0 %359
        %363 = vset.pattern.permute.xlu0 0
        %364 = vperm.xlu0 %363, %v355
        %v365 = vpop.permute.xlu0 %364
        %v368 = vperm.slane %v356, 0
        %v370 = vadd.f32 %v360, %v368
        %v371 = vadd.f32 %v365, %v368
        %v372 = vsub.f32 %v370, %v349
        %v373 = vsub.f32 %v371, %v351
        %vm374 = vcmask 130048
        %375 = vst.msk [vmem:[%s194] sm:$0xff] %vm374, %v372
        %376 = vst.msk [vmem:[%s194 + $0x8] sm:$0xff] %vm374, %v373
        %s377 = sand.u32 %s89, 1
        %s378 = scalar_lea.sflag [#allocation7], %s377
        %s379 = sand.u32 %s89, 1
        %s380 = smul.addr %s379, 16
        %s381 = scalar_lea.vmem [#allocation10], %s380
        // Predicated region
        $region41: #{tpu_custom_call.1} parent=27 // pred_check
          %p382 = pneg %p99
        $region42: #{tpu_custom_call.1} parent=27 // pred_check_branch
          %384 = sbr.rel (%p382) target = $region44
        $region43: #{tpu_custom_call.1} parent=27 // pred_region
          %s385 = smul.u32 2, %s25
          %387 = vsyncadd %s378, 0
          %s388 = smul.addr %s24, 2
          %s389 = sadd.s32 %s385, %s388
          %s390 = smul.addr %s389, 8
          %s391 = scalar_lea.hbm %s2, %s390
          %s392 = sshll.u32 %s381, 4
          %s393 = int_to_ptr.vmem [resolvable:$true] %s392
          %s394 = sshll.u32 %s391, 4
          %s395 = int_to_ptr.hbm [resolvable:$true] %s394
          %400 = dma.vmem_to_hbm [thread:$0]  %s393, 256, %s395, %s378, 128, 128, 8
        $region44: #{tpu_custom_call.1} parent=27 // pred_fallthru
          _
      $region28: #{tpu_custom_call.1} parent=5 // pred_fallthru
        _
      %p401 = scmp.le.s32.totalorder 2, %s15
      // Predicated region
      $region45: #{tpu_custom_call.1} parent=5 // pred_check
        %p402 = pneg %p401
      $region46: #{tpu_custom_call.1} parent=5 // pred_check_branch
        %404 = sbr.rel (%p402) target = $region48
      $region47: #{tpu_custom_call.1} parent=5 // pred_region
        %s405 = ssub.s32 %s15, 2
        // Predicated region
        $region49: #{tpu_custom_call.1} parent=47 // pred_check
          %p406 = pneg %p105
        $region50: #{tpu_custom_call.1} parent=47 // pred_check_branch
          %408 = sbr.rel (%p406) target = $region52
        $region51: #{tpu_custom_call.1} parent=47 // pred_region
          %s409 = sand.u32 %s90, 1
          %s410 = scalar_lea.sflag [#allocation7], %s409
          %s411 = sand.u32 %s90, 1
          %s412 = smul.addr %s411, 16
          %s413 = scalar_lea.vmem [#allocation10], %s412
          %415 = dma.done %s410, 256
        $region52: #{tpu_custom_call.1} parent=47 // pred_fallthru
          _
      $region48: #{tpu_custom_call.1} parent=5 // pred_fallthru
        _
    $region6: #{tpu_custom_call.1} parent=1 // loop_footer
      %s19 = sadd.s32 1, %s15
    $region7: #{tpu_custom_call.1} parent=1 // loop_footer_branch
      %14 = sbr.rel target = $region3
    $region8: #{tpu_custom_call.1} parent=1 // loop_exit
      _
    %416 = vsyncpa [#allocation6], 1
    %s417 = scalar_lea.sflag [#allocation6], 1
    %418 = vsyncpa %s417, 1
    %419 = vsyncpa [#allocation9], 1
    %420 = vsyncpa [#allocation7], 1
    %s421 = scalar_lea.sflag [#allocation7], 1
    %422 = vsyncpa %s421, 1

// kernel: tpu_custom_call.1
$region0: #{tpu_custom_call.1}
  #allocation0 [shape = 'u32[]', space=smem, size = 0x4, offset = 0x4, fixed_abs, tag = 'smem constant byte address 0x4 - core index']
  #allocation1 [shape = 'u32[72,128]{1,0:T(1,128)}', space=vmem, size = 0x9000, scoped, tag = 'internal scratch']
  #allocation2 [shape = 'bf16[1,16,128]{2,1,0:T(8,128)(2,1)}', space=vmem, size = 0x1000, scoped, tag = 'scratch operand']
  #allocation3 [shape = 'f32[1,16,1]{2,1,0:T(8,128)}', space=vmem, size = 0x2000, scoped, tag = 'scratch operand']
  #allocation4 [shape = 'f32[1,1,16]{2,1,0:T(1,128)}', space=vmem, size = 0x200, scoped, tag = 'scratch operand']
  %s0 = inlined_call_operand.hbm [shape: bf16[2,16,128], index: 0, kind: input, shape index: {}]
  %s1 = inlined_call_operand.hbm [shape: bf16[128,128], index: 1, kind: input, shape index: {}]
  %s2 = inlined_call_operand.hbm [shape: f32[2,16,16], index: 2, kind: output, shape index: {}]
  %s3 = sld [smem:[#allocation0]]
  $region53: #{tpu_custom_call.1} parent=0
    _
  %s5 = ssub.s32 1, %s3
  %s6 = scalar_select 0, %s5, %s3
  $region1: #{tpu_custom_call.1} parent=0
    #allocation5 [shape = 'u8[8192]{0}', space=vmem, size = 0x2000, scoped, tag = 'input window, operand 0']
    #allocation6 [shape = 's32[2]{0}', space=sflag, size = 0x8, scoped, tag = 'scoped memory for tpu_custom_call.1']
    #allocation7 [shape = 's32[2]{0}', space=sflag, size = 0x8, scoped, tag = 'scoped memory for tpu_custom_call.1']
    #allocation8 [shape = 'u8[32768]{0}', space=vmem, size = 0x8000, scoped, tag = 'input window, operand 1, single buffered']
    #allocation9 [shape = 's32[1]{0}', space=sflag, size = 0x4, scoped, tag = 'scoped memory for tpu_custom_call.1']
    #allocation10 [shape = 'u8[16384]{0}', space=vmem, size = 0x4000, scoped, tag = 'output window, operand 0']
    %7 = vsyncpa [#allocation6], 0
    %s8 = scalar_lea.sflag [#allocation6], 1
    %9 = vsyncpa %s8, 0
    %10 = vsyncpa [#allocation9], 0
    %11 = vsyncpa [#allocation7], 0
    %s12 = scalar_lea.sflag [#allocation7], 1
    %13 = vsyncpa %s12, 0
    loop: start=0, step=1, limit=4
    $region2: #{tpu_custom_call.1} parent=1 // loop_pre_header
      _
    $region3: #{tpu_custom_call.1} parent=1 // loop_header
      %s15 = sphi 0, %s19
      %p16 = scmp.ge.s32.totalorder %s15, 4
      %s22 = sphi 0, %s34
      %s23 = sphi 0, %s30
      %s24 = sphi 0, %s22
      %s25 = sphi 0, %s23
      %s26 = sphi 0, %s24
      %s27 = sphi 0, %s25
      %s37 = sphi 0, %s39
      %s40 = sphi 0, %s37
      %s41 = sphi 0, %s40
      %s57 = sphi 0, %s41
      %s61 = sphi 0, %s61
      %s63 = sphi 0, %s61
      %s64 = sphi 0, %s63
      %s78 = sphi 0, %s64
      %s86 = sphi 0, %s88
      %s89 = sphi 0, %s86
      %s90 = sphi 0, %s89
      %s106 = sphi 0, %s90
    $region4: #{tpu_custom_call.1} parent=1 // loop_header_branch
      %18 = sbr.rel (%p16) target = $region8
    $region5: #{tpu_custom_call.1} parent=1 // loop_body
      %s20 = ssub.s32 %s15, 1
      %s21 = ssub.s32 %s15, 2
      %s28 = sadd.s32 1, %s23
      %p29 = scmp.ge.s32.totalorder %s28, 1
      %s30 = scalar_select %p29, 0, %s28
      %s31 = sadd.s32 1, %s22
      %s32 = scalar_select %p29, %s31, %s22
      %p33 = scmp.ge.s32.totalorder %s32, 2
      %s34 = scalar_select %p33, 0, %s32
      %s35 = ssub.s32 %s22, %s34
      %p36 = scmp.eq.s32.totalorder %s35, 0
      %s38 = sadd.s32 %s37, 1
      %s39 = scalar_select %p36, %s37, %s38
      %p42 = pneg %p36
      %p43 = scmp.eq.s32.totalorder %s15, 1
      %p44 = por %p42, %p43
      %p45 = scmp.ne.s32.totalorder %s37, %s40
      %p46 = scmp.eq.s32.totalorder %s15, 0
      %p47 = por %p45, %p46
      %p48 = scmp.ne.s32.totalorder %s37, %s40
      %p49 = scmp.eq.s32.totalorder %s20, 1
      %p50 = por %p48, %p49
      %p51 = scmp.ne.s32.totalorder %s40, %s41
      %p52 = scmp.eq.s32.totalorder %s20, 0
      %p53 = por %p51, %p52
      %p54 = scmp.ne.s32.totalorder %s40, %s41
      %p55 = scmp.eq.s32.totalorder %s21, 1
      %p56 = por %p54, %p55
      %p58 = scmp.ne.s32.totalorder %s41, %s57
      %p59 = scmp.eq.s32.totalorder %s21, 0
      %p60 = por %p58, %p59
      %s62 = sadd.s32 %s61, 1
      %p65 = scmp.eq.s32.totalorder %s15, 1
      %p66 = scmp.ne.s32.totalorder %s61, %s63
      %p67 = scmp.eq.s32.totalorder %s15, 0
      %p68 = por %p66, %p67
      %p69 = scmp.ne.s32.totalorder %s61, %s63
      %p70 = scmp.eq.s32.totalorder %s20, 1
      %p71 = por %p69, %p70
      %p72 = scmp.ne.s32.totalorder %s63, %s64
      %p73 = scmp.eq.s32.totalorder %s20, 0
      %p74 = por %p72, %p73
      %p75 = scmp.ne.s32.totalorder %s63, %s64
      %p76 = scmp.eq.s32.totalorder %s21, 1
      %p77 = por %p75, %p76
      %p79 = scmp.ne.s32.totalorder %s64, %s78
      %p80 = scmp.eq.s32.totalorder %s21, 0
      %p81 = por %p79, %p80
      %s82 = ssub.s32 %s22, %s34
      %s83 = ssub.s32 %s23, %s30
      %s84 = sor.u32 %s82, %s83
      %p85 = scmp.eq.s32.totalorder %s84, 0
      %s87 = sadd.s32 %s86, 1
      %s88 = scalar_select %p85, %s86, %s87
      %p91 = pneg %p85
      %p92 = scmp.eq.s32.totalorder %s15, 1
      %p93 = por %p91, %p92
      %p94 = scmp.ne.s32.totalorder %s86, %s89
      %p95 = scmp.eq.s32.totalorder %s15, 0
      %p96 = por %p94, %p95
      %p97 = scmp.ne.s32.totalorder %s86, %s89
      %p98 = scmp.eq.s32.totalorder %s20, 1
      %p99 = por %p97, %p98
      %p100 = scmp.ne.s32.totalorder %s89, %s90
      %p101 = scmp.eq.s32.totalorder %s20, 0
      %p102 = por %p100, %p101
      %p103 = scmp.ne.s32.totalorder %s89, %s90
      %p104 = scmp.eq.s32.totalorder %s21, 1
      %p105 = por %p103, %p104
      %p107 = scmp.ne.s32.totalorder %s90, %s106
      %p108 = scmp.eq.s32.totalorder %s21, 0
      %p109 = por %p107, %p108
      %p110 = scmp.le.s32.totalorder 1, %s15
      %p111 = scmp.lt.s32.totalorder %s15, 3
      %p112 = pnand %p110, %p111
      %p113 = pneg %p112
      // Predicated region
      $region9: #{tpu_custom_call.1} parent=5 // pred_check
        _
      $region10: #{tpu_custom_call.1} parent=5 // pred_check_branch
        %115 = sbr.rel (%p112) target = $region12
      $region11: #{tpu_custom_call.1} parent=5 // pred_region
        %s116 = ssub.s32 %s15, 1
        // Predicated region
        $region13: #{tpu_custom_call.1} parent=11 // pred_check
          %p117 = pneg %p74
        $region14: #{tpu_custom_call.1} parent=11 // pred_check_branch
          %119 = sbr.rel (%p117) target = $region16
        $region15: #{tpu_custom_call.1} parent=11 // pred_region
          %121 = vsyncadd [#allocation9], 0
          %s122 = sshll.u32 %s1, 4
          %s123 = int_to_ptr.hbm [resolvable:$true] %s122
          %s124 = sshll.u32 [#allocation8], 4
          %s125 = int_to_ptr.vmem [resolvable:$true] %s124
          %130 = dma.hbm_to_vmem [thread:$0]  %s123, 1024, %s125, [#allocation9], 64, 64, 4
        $region16: #{tpu_custom_call.1} parent=11 // pred_fallthru
          _
      $region12: #{tpu_custom_call.1} parent=5 // pred_fallthru
        _
      %p131 = scmp.lt.s32.totalorder %s15, 2
      // Predicated region
      $region17: #{tpu_custom_call.1} parent=5 // pred_check
        %p132 = pneg %p131
      $region18: #{tpu_custom_call.1} parent=5 // pred_check_branch
        %134 = sbr.rel (%p132) target = $region20
      $region19: #{tpu_custom_call.1} parent=5 // pred_region
        // Predicated region
        $region21: #{tpu_custom_call.1} parent=19 // pred_check
          %p135 = pneg %p47
        $region22: #{tpu_custom_call.1} parent=19 // pred_check_branch
          %137 = sbr.rel (%p135) target = $region24
        $region23: #{tpu_custom_call.1} parent=19 // pred_region
          %s138 = sand.u32 %s37, 1
          %s139 = scalar_lea.sflag [#allocation6], %s138
          %s140 = sand.u32 %s37, 1
          %s141 = smul.addr %s140, 8
          %s142 = scalar_lea.vmem [#allocation5], %s141
          %144 = vsyncadd %s139, 0
          %s145 = smul.addr %s22, 2
          %s146 = smul.addr %s145, 4
          %s147 = scalar_lea.hbm %s0, %s146
          %s148 = sshll.u32 %s147, 4
          %s149 = int_to_ptr.hbm [resolvable:$true] %s148
          %s150 = sshll.u32 %s142, 4
          %s151 = int_to_ptr.vmem [resolvable:$true] %s150
          %156 = dma.hbm_to_vmem [thread:$0]  %s149, 128, %s151, %s139, 64, 64, 4
        $region24: #{tpu_custom_call.1} parent=19 // pred_fallthru
          _
      $region20: #{tpu_custom_call.1} parent=5 // pred_fallthru
        _
      %p157 = scmp.le.s32.totalorder 1, %s15
      %p158 = scmp.lt.s32.totalorder %s15, 3
      %p159 = pnand %p157, %p158
      %p160 = pneg %p159
      // Predicated region
      $region25: #{tpu_custom_call.1} parent=5 // pred_check
        _
      $region26: #{tpu_custom_call.1} parent=5 // pred_check_branch
        %162 = sbr.rel (%p159) target = $region28
      $region27: #{tpu_custom_call.1} parent=5 // pred_region
        %s163 = ssub.s32 %s15, 1
        %s164 = sand.u32 %s40, 1
        %s165 = scalar_lea.sflag [#allocation6], %s164
        %s166 = sand.u32 %s40, 1
        %s167 = smul.addr %s166, 8
        %s168 = scalar_lea.vmem [#allocation5], %s167
        // Predicated region
        $region29: #{tpu_custom_call.1} parent=27 // pred_check
          %p169 = pneg %p53
        $region30: #{tpu_custom_call.1} parent=27 // pred_check_branch
          %171 = sbr.rel (%p169) target = $region32
        $region31: #{tpu_custom_call.1} parent=27 // pred_region
          %173 = dma.done %s165, 128
        $region32: #{tpu_custom_call.1} parent=27 // pred_fallthru
          _
        // Predicated region
        $region33: #{tpu_custom_call.1} parent=27 // pred_check
          %p174 = pneg %p74
        $region34: #{tpu_custom_call.1} parent=27 // pred_check_branch
          %176 = sbr.rel (%p174) target = $region36
        $region35: #{tpu_custom_call.1} parent=27 // pred_region
          %178 = dma.done [#allocation9], 1024
        $region36: #{tpu_custom_call.1} parent=27 // pred_fallthru
          _
        %s179 = sand.u32 %s40, 1
        %s180 = scalar_lea.sflag [#allocation6], %s179
        %s181 = sand.u32 %s40, 1
        %s182 = smul.addr %s181, 8
        %s183 = scalar_lea.vmem [#allocation5], %s182
        %p184 = pneg %p53
        %p185 = pneg %p50
        %p186 = pneg %p74
        %p187 = pneg %p71
        %p188 = pneg %p102
        %p189 = pneg %p99
        %s190 = sand.u32 %s89, 1
        %s191 = scalar_lea.sflag [#allocation7], %s190
        %s192 = sand.u32 %s89, 1
        %s193 = smul.addr %s192, 16
        %s194 = scalar_lea.vmem [#allocation10], %s193
        %s195 = smul.u32 2, %s25
        %p197 = scmp.eq.s32.totalorder %s25, 0
        // Predicated region
        $region37: #{tpu_custom_call.1} parent=27 // pred_check
          %p198 = pneg %p197
        $region38: #{tpu_custom_call.1} parent=27 // pred_check_branch
          %200 = sbr.rel (%p198) target = $region40
        $region39: #{tpu_custom_call.1} parent=27 // pred_region
          %v201 = vld [vmem:[%s168] sm:$0xf]
          %v202 = vld [vmem:[%s168 + $0x4] sm:$0xf]
          %v203 = vld [vmem:[#allocation8] sm:$0xf]
          %v204 = vld [vmem:[#allocation8 + $0x4] sm:$0xf]
          %v205 = vld [vmem:[#allocation8 + $0x8] sm:$0xf]
          %v206 = vld [vmem:[#allocation8 + $0xc] sm:$0xf]
          %v207 = vld [vmem:[#allocation8 + $0x10] sm:$0xf]
          %v208 = vld [vmem:[#allocation8 + $0x14] sm:$0xf]
          %v209 = vld [vmem:[#allocation8 + $0x18] sm:$0xf]
          %v210 = vld [vmem:[#allocation8 + $0x1c] sm:$0xf]
          %v211 = vld [vmem:[#allocation8 + $0x20] sm:$0xf]
          %v212 = vld [vmem:[#allocation8 + $0x24] sm:$0xf]
          %v213 = vld [vmem:[#allocation8 + $0x28] sm:$0xf]
          %v214 = vld [vmem:[#allocation8 + $0x2c] sm:$0xf]
          %v215 = vld [vmem:[#allocation8 + $0x30] sm:$0xf]
          %v216 = vld [vmem:[#allocation8 + $0x34] sm:$0xf]
          %v217 = vld [vmem:[#allocation8 + $0x38] sm:$0xf]
          %v218 = vld [vmem:[#allocation8 + $0x3c] sm:$0xf]
          %v221 = vunpack.c.l.b16 %v201
          %v222 = vunpack.c.l.b16 %v202
          %v223 = vpack.c.b16 %v222, %v221
          %v241 = vunpack.c.l.b16 %v203
          %v242 = vunpack.c.l.b16 %v204
          %v243 = vunpack.c.l.b16 %v205
          %v244 = vunpack.c.l.b16 %v206
          %v245 = vunpack.c.l.b16 %v207
          %v246 = vunpack.c.l.b16 %v208
          %v247 = vunpack.c.l.b16 %v209
          %v248 = vunpack.c.l.b16 %v210
          %v249 = vunpack.c.l.b16 %v211
          %v250 = vunpack.c.l.b16 %v212
          %v251 = vunpack.c.l.b16 %v213
          %v252 = vunpack.c.l.b16 %v214
          %v253 = vunpack.c.l.b16 %v215
          %v254 = vunpack.c.l.b16 %v216
          %v255 = vunpack.c.l.b16 %v217
          %v256 = vunpack.c.l.b16 %v218
          %v257 = vpack.c.b16 %v242, %v241
          %v258 = vpack.c.b16 %v244, %v243
          %v259 = vpack.c.b16 %v246, %v245
          %v260 = vpack.c.b16 %v248, %v247
          %v261 = vpack.c.b16 %v250, %v249
          %v262 = vpack.c.b16 %v252, %v251
          %v263 = vpack.c.b16 %v254, %v253
          %v264 = vpack.c.b16 %v256, %v255
          %273 = vmatpush.bf16.msra.mxu0 %v264
          %274 = vmatpush.bf16.msra.mxu0 %v263
          %275 = vmatpush.bf16.msra.mxu0 %v262
          %276 = vmatpush.bf16.msra.mxu0 %v261
          %277 = vmatpush.bf16.msra.mxu0 %v260
          %278 = vmatpush.bf16.msra.mxu0 %v259
          %279 = vmatpush.bf16.msra.mxu0 %v258
          %280 = vmatpush.bf16.msra.mxu0 %v257
          %281 = vmatmul.bf16.gmra.mxu0 %v223
          %v282 = vpop.f32.mrf.mxu0
          %v283 = vadd.f32 0.0, %v282
          %v284 = vpop.f32.mrf.mxu0
          %v285 = vadd.f32 0.0, %v284
          %286 = vdwg.mxu0
          %v287 = vpack.c.bf16 %v283, %v283
          %v288 = vpack.c.bf16 %v285, %v285
          %289 = vst [vmem:[#allocation2] sm:$0xf] %v287
          %290 = vst [vmem:[#allocation2 + $0x4] sm:$0xf] %v288
          %v291 = vunpack.c.l.bf16 %v287
          %v292 = vunpack.c.l.bf16 %v288
          %v293 = vunpack.c.l.bf16 %v201
          %v294 = vunpack.c.l.bf16 %v202
          %v295 = vmul.f32 %v291, %v293
          %v296 = vmul.f32 %v292, %v294
          %297 = vadd.xlane.f32.xlu0 %v295
          %v298 = vpop.xlane.xlu0 %297
          %299 = vadd.xlane.f32.xlu0 %v296
          %v300 = vpop.xlane.xlu0 %299
          %v301 = vmul.f32 %v298, 0.5
          %v302 = vmul.f32 %v300, 0.5
          %vm303 = vcmask 7168
          %304 = vst.msk [vmem:[#allocation3] sm:$0xff] %vm303, %v301
          %305 = vst.msk [vmem:[#allocation3 + $0x8] sm:$0xff] %vm303, %v302
          %v308 = vlaneseq
          %v309 = vand.u32 %v308, 127
          %v310 = vperm.slane %v301, %v309
          %v311 = vadd.s32 %v309, 4294967288
          %v312 = vperm.slane %v302, %v311
          %vm313 = vcmask 130112
          %v314 = vsel %vm313, %v312, %v310
          %vm316 = vcmask 122880
          %317 = vst.msk [vmem:[#allocation4] sm:$0x1] %vm316, %v314
        $region40: #{tpu_custom_call.1} parent=27 // pred_fallthru
          _
        %s318 = smul.u32 %s25, 16
        %s319 = sshra.s32 %s318, 3
        %s320 = sand.u32 %s318, 7
        %s321 = smul.addr %s319, 4
        %s322 = scalar_lea.vmem [#allocation2], %s321
        %v323 = vld [vmem:[%s322] sm:$0xf]
        %v324 = vld [vmem:[%s322 + $0x4] sm:$0xf]
        %v325 = vld [vmem:[%s168] sm:$0xf]
        %v326 = vld [vmem:[%s168 + $0x4] sm:$0xf]
        %v329 = vunpack.c.l.b16 %v323
        %v330 = vunpack.c.l.b16 %v324
        %v331 = vpack.c.b16 %v330, %v329
        %v335 = vunpack.c.l.b16 %v325
        %v336 = vunpack.c.l.b16 %v326
        %v337 = vpack.c.b16 %v336, %v335
        %339 = vmatpush.bf16.xpose.msra.mxu0 0
        %340 = vmatpush.bf16.xpose.msra.mxu0 0
        %341 = vmatpush.bf16.xpose.msra.mxu0 0
        %342 = vmatpush.bf16.xpose.msra.mxu0 0
        %343 = vmatpush.bf16.xpose.msra.mxu0 0
        %344 = vmatpush.bf16.xpose.msra.mxu0 0
        %345 = vmatpush.bf16.xpose.msra.mxu0 0
        %346 = vmatpush.bf16.xpose.msra.mxu0 %v337
        %347 = vmatmul.bf16.gmra.mxu0 %v331
        %v348 = vpop.f32.mrf.mxu0
        %v349 = vadd.f32 0.0, %v348
        %v350 = vpop.f32.mrf.mxu0
        %v351 = vadd.f32 0.0, %v350
        %352 = vdwg.mxu0
        %s353 = scalar_lea.vmem [#allocation3], %s318
        %v354 = vld [vmem:[%s353] sm:$0xff]
        %v355 = vld [vmem:[%s353 + $0x8] sm:$0xff]
        %v356 = vld [vmem:[#allocation4] sm:$0x1]
        %358 = vset.pattern.permute.xlu0 0
        %359 = vperm.xlu0 %358, %v354
        %v360 = vpop.permute.xlu0 %359
        %363 = vset.pattern.permute.xlu0 0
        %364 = vperm.xlu0 %363, %v355
        %v365 = vpop.permute.xlu0 %364
        %v368 = vperm.slane %v356, 0
        %v370 = vadd.f32 %v360, %v368
        %v371 = vadd.f32 %v365, %v368
        %v372 = vsub.f32 %v370, %v349
        %v373 = vsub.f32 %v371, %v351
        %vm374 = vcmask 130048
        %375 = vst.msk [vmem:[%s194] sm:$0xff] %vm374, %v372
        %376 = vst.msk [vmem:[%s194 + $0x8] sm:$0xff] %vm374, %v373
        %s377 = sand.u32 %s89, 1
        %s378 = scalar_lea.sflag [#allocation7], %s377
        %s379 = sand.u32 %s89, 1
        %s380 = smul.addr %s379, 16
        %s381 = scalar_lea.vmem [#allocation10], %s380
        // Predicated region
        $region41: #{tpu_custom_call.1} parent=27 // pred_check
          %p382 = pneg %p99
        $region42: #{tpu_custom_call.1} parent=27 // pred_check_branch
          %384 = sbr.rel (%p382) target = $region44
        $region43: #{tpu_custom_call.1} parent=27 // pred_region
          %s385 = smul.u32 2, %s25
          %387 = vsyncadd %s378, 0
          %s388 = smul.addr %s24, 2
          %s389 = sadd.s32 %s385, %s388
          %s390 = smul.addr %s389, 8
          %s391 = scalar_lea.hbm %s2, %s390
          %s392 = sshll.u32 %s381, 4
          %s393 = int_to_ptr.vmem [resolvable:$true] %s392
          %s394 = sshll.u32 %s391, 4
          %s395 = int_to_ptr.hbm [resolvable:$true] %s394
          %400 = dma.vmem_to_hbm [thread:$0]  %s393, 256, %s395, %s378, 128, 128, 8
        $region44: #{tpu_custom_call.1} parent=27 // pred_fallthru
          _
      $region28: #{tpu_custom_call.1} parent=5 // pred_fallthru
        _
      %p401 = scmp.le.s32.totalorder 2, %s15
      // Predicated region
      $region45: #{tpu_custom_call.1} parent=5 // pred_check
        %p402 = pneg %p401
      $region46: #{tpu_custom_call.1} parent=5 // pred_check_branch
        %404 = sbr.rel (%p402) target = $region48
      $region47: #{tpu_custom_call.1} parent=5 // pred_region
        %s405 = ssub.s32 %s15, 2
        // Predicated region
        $region49: #{tpu_custom_call.1} parent=47 // pred_check
          %p406 = pneg %p105
        $region50: #{tpu_custom_call.1} parent=47 // pred_check_branch
          %408 = sbr.rel (%p406) target = $region52
        $region51: #{tpu_custom_call.1} parent=47 // pred_region
          %s409 = sand.u32 %s90, 1
          %s410 = scalar_lea.sflag [#allocation7], %s409
          %s411 = sand.u32 %s90, 1
          %s412 = smul.addr %s411, 16
          %s413 = scalar_lea.vmem [#allocation10], %s412
          %415 = dma.done %s410, 256
        $region52: #{tpu_custom_call.1} parent=47 // pred_fallthru
          _
      $region48: #{tpu_custom_call.1} parent=5 // pred_fallthru
        _
    $region6: #{tpu_custom_call.1} parent=1 // loop_footer
      %s19 = sadd.s32 1, %s15
    $region7: #{tpu_custom_call.1} parent=1 // loop_footer_branch
      %14 = sbr.rel target = $region3
    $region8: #{tpu_custom_call.1} parent=1 // loop_exit
      _
    %416 = vsyncpa [#allocation6], 1
    %s417 = scalar_lea.sflag [#allocation6], 1
    %418 = vsyncpa %s417, 1
    %419 = vsyncpa [#allocation9], 1
    %420 = vsyncpa [#allocation7], 1
    %s421 = scalar_lea.sflag [#allocation7], 1
    %422 = vsyncpa %s421, 1

</llo_original>
